<compile_context>
chip_gen: v5e
topology: v5e:2x2
jax: 0.10.0
libtpu: 0.0.40
codegen_flags: <defaults>
</compile_context>

<pallas_src>
import functools
import math

import jax
import jax.numpy as jnp
from jax import lax
from jax.experimental import pallas as pl
from jax.experimental.pallas import tpu as pltpu


def _round_up(x, m):
    return ((x + m - 1) // m) * m


def _pow_gamma(x, gamma):
    g = float(gamma)
    if g.is_integer() and g >= 0:
        out = jnp.ones_like(x)
        for _ in range(int(g)):
            out = out * x
        return out
    return jnp.power(x, g)


def _loss_kernel(yp_ref, yb_ref, anc_ref, alpha_ref, out_ref, *,
                 num_classes, gamma, background_class, a_total, tile_c):
    """Per-(anchor-tile, batch) block: rows = [focal, pos, neg, pos*(1-iou)]."""
    C = num_classes
    TC = tile_c
    TN = out_ref.shape[-1]
    n_chunks = TN // TC

    alpha_col = alpha_ref[...].astype(jnp.float32)            # (C, 1) per-class weight
    tile_base = pl.program_id(0) * TN                         # first anchor of this tile

    # Hoisted out of the chunk loop (JAX does not CSE broadcast/iota).
    cls_iota = lax.broadcasted_iota(jnp.int32, (C, TC), 0)
    lane_iota = lax.broadcasted_iota(jnp.int32, (1, TC), 1)

    def chunk(j, carry):
        off = pl.multiple_of(j * TC, TC)
        sl = pl.ds(off, TC)

        # Loads are cast to f32 in-kernel so bf16 inputs halve HBM read traffic
        # while all math stays f32 (safe on v5e, which has no bf16 VPU/EUP).
        yp = yp_ref[:, sl].astype(jnp.float32)                 # (C+4, TC)
        yb = yb_ref[:, sl].astype(jnp.float32)                 # (C+4, TC)
        anc = anc_ref[:, sl].astype(jnp.float32)               # (4, TC): acx, acy, aw, ah

        c_pre = yp[:C]
        b_pre = yp[C:C + 4]
        c_hat = yb[:C]
        b_hat = yb[C:C + 4]

        # Ground-truth class id = argmax over classes (first-index ties).  The
        # value at the argmax IS the max, so no extra gather reduction is needed.
        max_val = jnp.max(c_hat, axis=0, keepdims=True)                         # (1, TC)
        gt_ids = jnp.min(jnp.where(c_hat == max_val, cls_iota, C),
                         axis=0, keepdims=True)                                 # (1, TC)
        onehot = (cls_iota == gt_ids).astype(jnp.float32)                       # (C, TC)

        pos = (gt_ids != background_class) & (max_val == 1.0)                   # (1, TC)
        neg = gt_ids == background_class                                        # (1, TC)

        # Focal loss: log_softmax over classes, gathered at gt class via onehot.
        m = jnp.max(c_pre, axis=0, keepdims=True)
        z = c_pre - m
        lse = jnp.log(jnp.sum(jnp.exp(z), axis=0, keepdims=True))
        logpt = jnp.sum((z - lse) * onehot, axis=0, keepdims=True)              # (1, TC)
        pt = jnp.exp(logpt)
        at = jnp.sum(alpha_col * onehot, axis=0, keepdims=True)                 # (1, TC)
        focal = -_pow_gamma(1.0 - pt, gamma) * (logpt * at)

        # Box decode (anchors pre-converted to center-size on host) and IoU.
        # TODO(synk): decode_boxes was not provided in the source; standard
        # SSD-style decode without variance/scale factors assumed.
        acx = anc[0:1]; acy = anc[1:2]; aw = anc[2:3]; ah = anc[3:4]

        def decode(regs):
            cx = regs[0:1] * aw + acx
            cy = regs[1:2] * ah + acy
            w = jnp.exp(regs[2:3]) * aw
            h = jnp.exp(regs[3:4]) * ah
            return cx - 0.5 * w, cy - 0.5 * h, cx + 0.5 * w, cy + 0.5 * h

        px1, py1, px2, py2 = decode(b_pre)
        tx1, ty1, tx2, ty2 = decode(b_hat)

        iw = jnp.maximum(jnp.minimum(px2, tx2) - jnp.maximum(px1, tx1), 0.0)
        ih = jnp.maximum(jnp.minimum(py2, ty2) - jnp.maximum(py1, ty1), 0.0)
        inter = iw * ih
        area1 = jnp.maximum(px2 - px1, 0.0) * jnp.maximum(py2 - py1, 0.0)
        area2 = jnp.maximum(tx2 - tx1, 0.0) * jnp.maximum(ty2 - ty1, 0.0)
        union = area1 + area2 - inter
        iou = inter / (union + 1e-8)   # exact divide: mem-bound, keep numeric parity

        # Tail mask: the last anchor tile may run past a_total (no host pad);
        # zero those lanes so garbage-derived NaN/Inf never leaves the kernel.
        valid = (lane_iota + (tile_base + off)) < a_total                        # (1, TC)

        # Direct row stores (no concat temp / sublane relayout); lane dim stays
        # a dense multiple of 128.
        out_ref[0:1, sl] = jnp.where(valid, focal, 0.0)
        out_ref[1:2, sl] = jnp.where(valid & pos, 1.0, 0.0)
        out_ref[2:3, sl] = jnp.where(valid & neg, 1.0, 0.0)
        # IoU loss pre-masked by pos (reference only decodes positives), so a
        # stray NaN on a non-positive anchor cannot poison the glue-side sum.
        out_ref[3:4, sl] = jnp.where(valid & pos, 1.0 - iou, 0.0)
        return carry

    lax.fori_loop(0, n_chunks, chunk, 0)


def custom_loss(y_pre, y_batch, anchor_boxes_xyxy, *, num_classes, beta=0.5,
                neg_pos_ratio=3, gamma=2.0, alpha=None, background_class=0,
                tile_n=2048, compute_chunk=512, max_hard_negatives=4096):
    """Pallas implementation of CustomLoss.forward. Returns (total, cls, reg)."""
    y_pre = jnp.asarray(y_pre)
    y_batch = jnp.asarray(y_batch)
    if not jnp.issubdtype(y_pre.dtype, jnp.floating):
        y_pre = y_pre.astype(jnp.float32)
    if not jnp.issubdtype(y_batch.dtype, jnp.floating):
        y_batch = y_batch.astype(jnp.float32)
    anchors = jnp.asarray(anchor_boxes_xyxy, jnp.float32)

    B, A, F = y_pre.shape
    C = num_classes
    assert F == C + 4, f"expected last dim {C + 4}, got {F}"
    N = B * A

    if alpha is None:
        alpha = [0.25] + [1.0] * (C - 1) if C > 1 else [1.0]
    if isinstance(alpha, (int, float)):
        alpha = [float(alpha), 1.0 - float(alpha)]
    alpha = [float(a) for a in alpha]
    assert len(alpha) == C, f"alpha must have {C} entries, got {len(alpha)}"
    alpha_arr = jnp.asarray(alpha, jnp.float32).reshape(C, 1)   # real input, not a captured const

    # Lane-major layout: anchors along the 128-wide lane axis.
    # TODO(synk): this transpose is one extra HBM pass per tensor; ideally the
    # producer emits (B, C+4, A) directly so the kernel streams without it.
    yp = jnp.transpose(y_pre, (0, 2, 1))          # (B, C+4, A)
    yb = jnp.transpose(y_batch, (0, 2, 1))        # (B, C+4, A)

    # Anchors pre-converted once to center-size (acx, acy, aw, ah): same DMA
    # footprint, a few fewer VPU ops per anchor per grid step.
    ax1, ay1, ax2, ay2 = anchors[:, 0], anchors[:, 1], anchors[:, 2], anchors[:, 3]
    aw = ax2 - ax1
    ah = ay2 - ay1
    anc_feat = jnp.stack([ax1 + 0.5 * aw, ay1 + 0.5 * ah, aw, ah], axis=0)   # (4, A)

    # --- tile sizing -------------------------------------------------------
    # Big lane tiles amortize the ~0.35us per-grid-step overhead; no host pad
    # (ragged last tile masked in-kernel).  Cap TN so double-buffered input
    # blocks stay <= ~8 MiB: fits v5e's 16 MiB scoped default and v7x's 64 MiB.
    itemsize = max(jnp.dtype(yp.dtype).itemsize, jnp.dtype(yb.dtype).itemsize)
    TN = _round_up(min(int(tile_n), _round_up(A, 128)), 128)
    max_tn = max(128, ((8 << 20) // (2 * 2 * (C + 4) * itemsize)) // 128 * 128)
    TN = min(TN, max_tn)
    # Inner compute chunk bounds vreg pressure in the decode/IoU section.
    TC = min(_round_up(int(compute_chunk), 128), TN)
    while TN % TC:
        TC -= 128

    n_tiles = pl.cdiv(A, TN)
    grid = (n_tiles, B)   # anchor tiles outer, batch inner: balanced megacore
                          # split; anchors/alpha blocks constant over inner loop.

    in_blocks = 2 * 2 * (C + 4) * TN * itemsize          # yp + yb, double-buffered
    aux_blocks = 2 * 2 * 4 * TN * 4 + 8 * 128 * 4        # anchors + out + alpha
    interm = 32 * max(C + 4, 8) * TC * 4                 # per-chunk temporaries (generous)
    vmem_limit = int(max(16 << 20,
                         min(48 << 20, in_blocks + aux_blocks + interm + (2 << 20))))

    kernel = functools.partial(_loss_kernel, num_classes=C, gamma=gamma,
                               background_class=background_class,
                               a_total=A, tile_c=TC)

    out = pl.pallas_call(
        kernel,
        out_shape=jax.ShapeDtypeStruct((B, 4, A), jnp.float32),
        grid=grid,
        in_specs=[
            pl.BlockSpec((None, C + 4, TN), lambda i, b: (b, 0, i)),   # y_pre
            pl.BlockSpec((None, C + 4, TN), lambda i, b: (b, 0, i)),   # y_batch
            pl.BlockSpec((4, TN), lambda i, b: (0, i)),                # anchors (shared over b)
            pl.BlockSpec((C, 1), lambda i, b: (0, 0)),                 # alpha (shared over all)
        ],
        out_specs=pl.BlockSpec((None, 4, TN), lambda i, b: (b, 0, i)),
        compiler_params=pltpu.CompilerParams(
            dimension_semantics=("parallel", "parallel"),
            vmem_limit_bytes=vmem_limit),
    )(yp, yb, anc_feat, alpha_arr)

    focal = out[:, 0, :]                          # (B, A)
    pos = out[:, 1, :]
    neg = out[:, 2, :]
    iou_l = out[:, 3, :]                          # already masked by pos in-kernel

    # ---- plain-JAX glue: counts, hard-negative mining, scalar combine ----
    num_pos = jnp.sum(pos)
    num_neg = jnp.sum(neg)

    pos_mean = jnp.sum(focal * pos) / jnp.maximum(num_pos, 1.0)

    # Hard-negative mining with a capped static-bound top_k (replaces the full
    # sort).  k = min(num_neg, floor(num_pos*ratio)) <= ratio*N/(ratio+1); the
    # static cap keeps top_k from degenerating into a full sort at large N.
    # TODO(synk): if num_pos*ratio exceeds max_hard_negatives, only the top
    # max_hard_negatives negatives are averaged (minor deviation from reference).
    # Mining is global over the flattened batch, matching the reference.
    r = float(neg_pos_ratio)
    k_max = min(N, int(math.floor(r * N / (r + 1.0))) + 1)
    if max_hard_negatives is not None:
        k_max = min(k_max, int(max_hard_negatives))
    k_max = max(k_max, 1)
    neg_losses = jnp.where(neg.reshape(-1) > 0, focal.reshape(-1), -jnp.inf)
    topk_vals, _ = lax.top_k(neg_losses, k_max)
    k = jnp.minimum(jnp.minimum(num_neg, jnp.floor(num_pos * r)), float(k_max))
    take = jnp.arange(k_max, dtype=jnp.float32) < k
    hard_neg_mean = jnp.sum(jnp.where(take, topk_vals, 0.0)) / jnp.maximum(k, 1.0)

    cls_loss = jnp.where((num_pos > 0) & (num_neg > 0),
                         pos_mean + hard_neg_mean, 0.0)
    reg_loss = jnp.where(num_pos > 0,
                         jnp.sum(iou_l) / jnp.maximum(num_pos, 1.0), 0.0)
    total = beta * cls_loss + (1.0 - beta) * reg_loss
    return total, cls_loss, reg_loss


if __name__ == "__main__":
    key = jax.random.PRNGKey(0)
    B, A, C = 2, 64, 4           # batch, num_anchors, num_classes -> y_* is (B, A, C+4)

    k1, k2, k3, k4, k5, k6, k7, k8 = jax.random.split(key, 8)

    # Deterministic anchors (xyxy, valid boxes).
    cx = jax.random.uniform(k1, (A,), minval=0.2, maxval=0.8)
    cy = jax.random.uniform(k2, (A,), minval=0.2, maxval=0.8)
    w = jax.random.uniform(k3, (A,), minval=0.05, maxval=0.2)
    h = jax.random.uniform(k4, (A,), minval=0.05, maxval=0.2)
    anchors = jnp.stack([cx - w / 2, cy - h / 2, cx + w / 2, cy + h / 2], axis=-1)

    # Ground truth: one-hot classes (0 = background) + target box regressions.
    gt_ids = jax.random.randint(k5, (B, A), 0, C)
    c_hat = jax.nn.one_hot(gt_ids, C, dtype=jnp.float32)
    b_hat = 0.1 * jax.random.normal(k6, (B, A, 4), dtype=jnp.float32)
    y_batch = jnp.concatenate([c_hat, b_hat], axis=-1)

    # Predictions: class logits + box regressions.
    y_pre = jnp.concatenate(
        [jax.random.normal(k7, (B, A, C), dtype=jnp.float32),
         0.1 * jax.random.normal(k8, (B, A, 4), dtype=jnp.float32)], axis=-1)

    total, cls_l, reg_l = custom_loss(y_pre, y_batch, anchors, num_classes=C,
                                      beta=0.5, neg_pos_ratio=3, gamma=2.0)
    jax.block_until_ready(total)
    assert bool(jnp.isfinite(total)) and bool(jnp.isfinite(cls_l)) and bool(jnp.isfinite(reg_l))
    print("KERNEL_OK")
</pallas_src>

<mosaic_0001>
module attributes {stable_mosaic.version = 11 : i64} {
  func.func @_loss_kernel(%arg0: i32, %arg1: i32, %arg2: memref<1x8x128xf32, #tpu.memory_space<vmem>>, %arg3: memref<1x8x128xf32, #tpu.memory_space<vmem>>, %arg4: memref<4x128xf32, #tpu.memory_space<vmem>>, %arg5: memref<4x1xf32, #tpu.memory_space<vmem>>, %arg6: memref<1x4x128xf32, #tpu.memory_space<vmem>>) attributes {dimension_semantics = [#tpu.dimension_semantics<parallel>, #tpu.dimension_semantics<parallel>], iteration_bounds = array<i64: 1, 2>, scalar_prefetch = 0 : i64, scratch_operands = 0 : i64, tpu.core_type = #tpu.core_type<tc>, window_params = [{transform_indices = @transform_0, window_bounds = array<i64: 1, 8, 128>}, {transform_indices = @transform_1, window_bounds = array<i64: 1, 8, 128>}, {transform_indices = @transform_2, window_bounds = array<i64: 4, 128>}, {pipeline_mode = #tpu.pipeline_mode<synchronous>, transform_indices = @transform_3, window_bounds = array<i64: 4, 1>}, {transform_indices = @transform_4, window_bounds = array<i64: 1, 4, 128>}]} {
    %c0 = arith.constant 0 : index
    %c0_0 = arith.constant 0 : index
    %0 = vector.load %arg5[%c0, %c0_0] : memref<4x1xf32, #tpu.memory_space<vmem>>, vector<4x1xf32>
    %c128_i32 = arith.constant 128 : i32
    %1 = arith.muli %arg0, %c128_i32 : i32
    %2 = tpu.iota {dimensions = array<i32: 0>} : vector<4x128xi32>
    %3 = tpu.iota {dimensions = array<i32: 1>} : vector<1x128xi32>
    %c0_i32 = arith.constant 0 : i32
    %c128_i32_1 = arith.constant 128 : i32
    %4 = arith.muli %c0_i32, %c128_i32_1 : i32
    %5 = tpu.assume_multiple %4, 128 : i32
    %c0_2 = arith.constant 0 : index
    %c0_3 = arith.constant 0 : index
    %6 = arith.index_cast %5 : i32 to index
    %7 = vector.load %arg2[%c0_2, %c0_3, %6] : memref<1x8x128xf32, #tpu.memory_space<vmem>>, vector<1x8x128xf32>
    %8 = vector.shape_cast %7 : vector<1x8x128xf32> to vector<8x128xf32>
    %c0_4 = arith.constant 0 : index
    %c0_5 = arith.constant 0 : index
    %9 = arith.index_cast %5 : i32 to index
    %10 = vector.load %arg3[%c0_4, %c0_5, %9] : memref<1x8x128xf32, #tpu.memory_space<vmem>>, vector<1x8x128xf32>
    %11 = vector.shape_cast %10 : vector<1x8x128xf32> to vector<8x128xf32>
    %c0_6 = arith.constant 0 : index
    %12 = arith.index_cast %5 : i32 to index
    %13 = vector.load %arg4[%c0_6, %12] : memref<4x128xf32, #tpu.memory_space<vmem>>, vector<4x128xf32>
    %14 = vector.extract_strided_slice %8 {offsets = [0, 0], sizes = [4, 128], strides = [1, 1]} : vector<8x128xf32> to vector<4x128xf32>
    %15 = vector.extract_strided_slice %8 {offsets = [4, 0], sizes = [4, 128], strides = [1, 1]} : vector<8x128xf32> to vector<4x128xf32>
    %16 = vector.extract_strided_slice %11 {offsets = [0, 0], sizes = [4, 128], strides = [1, 1]} : vector<8x128xf32> to vector<4x128xf32>
    %17 = vector.extract_strided_slice %11 {offsets = [4, 0], sizes = [4, 128], strides = [1, 1]} : vector<8x128xf32> to vector<4x128xf32>
    %cst = arith.constant dense<0xFF800000> : vector<128xf32>
    %18 = vector.multi_reduction <maximumf>, %16, %cst [0] : vector<4x128xf32> to vector<128xf32>
    %19 = vector.shape_cast %18 : vector<128xf32> to vector<1x128xf32>
    %20 = vector.broadcast %19 : vector<1x128xf32> to vector<4x128xf32>
    %21 = arith.cmpf oeq, %16, %20 : vector<4x128xf32>
    %c4_i32 = arith.constant 4 : i32
    %22 = vector.broadcast %c4_i32 : i32 to vector<4x128xi32>
    %23 = arith.select %21, %2, %22 : vector<4x128xi1>, vector<4x128xi32>
    %cst_7 = arith.constant dense<2147483647> : vector<128xi32>
    %24 = vector.multi_reduction <minsi>, %23, %cst_7 [0] : vector<4x128xi32> to vector<128xi32>
    %25 = vector.shape_cast %24 : vector<128xi32> to vector<1x128xi32>
    %26 = vector.broadcast %25 : vector<1x128xi32> to vector<4x128xi32>
    %27 = arith.cmpi eq, %2, %26 : vector<4x128xi32>
    %28 = arith.extui %27 : vector<4x128xi1> to vector<4x128xi32>
    %29 = arith.sitofp %28 : vector<4x128xi32> to vector<4x128xf32>
    %c0_i32_8 = arith.constant 0 : i32
    %30 = vector.broadcast %c0_i32_8 : i32 to vector<1x128xi32>
    %31 = arith.cmpi ne, %25, %30 : vector<1x128xi32>
    %cst_9 = arith.constant 1.000000e+00 : f32
    %32 = vector.broadcast %cst_9 : f32 to vector<1x128xf32>
    %33 = arith.cmpf oeq, %19, %32 : vector<1x128xf32>
    %34 = arith.andi %31, %33 : vector<1x128xi1>
    %c0_i32_10 = arith.constant 0 : i32
    %35 = vector.broadcast %c0_i32_10 : i32 to vector<1x128xi32>
    %36 = arith.cmpi eq, %25, %35 : vector<1x128xi32>
    %cst_11 = arith.constant dense<0xFF800000> : vector<128xf32>
    %37 = vector.multi_reduction <maximumf>, %14, %cst_11 [0] : vector<4x128xf32> to vector<128xf32>
    %38 = vector.shape_cast %37 : vector<128xf32> to vector<1x128xf32>
    %39 = vector.broadcast %38 : vector<1x128xf32> to vector<4x128xf32>
    %40 = arith.subf %14, %39 : vector<4x128xf32>
    %41 = math.exp %40 : vector<4x128xf32>
    %cst_12 = arith.constant dense<0.000000e+00> : vector<128xf32>
    %42 = vector.multi_reduction <add>, %41, %cst_12 [0] : vector<4x128xf32> to vector<128xf32>
    %43 = vector.shape_cast %42 : vector<128xf32> to vector<1x128xf32>
    %44 = math.log %43 : vector<1x128xf32>
    %45 = vector.broadcast %44 : vector<1x128xf32> to vector<4x128xf32>
    %46 = arith.subf %40, %45 : vector<4x128xf32>
    %47 = arith.mulf %46, %29 : vector<4x128xf32>
    %cst_13 = arith.constant dense<0.000000e+00> : vector<128xf32>
    %48 = vector.multi_reduction <add>, %47, %cst_13 [0] : vector<4x128xf32> to vector<128xf32>
    %49 = vector.shape_cast %48 : vector<128xf32> to vector<1x128xf32>
    %50 = math.exp %49 : vector<1x128xf32>
    %51 = vector.broadcast %0 : vector<4x1xf32> to vector<4x128xf32>
    %52 = arith.mulf %51, %29 : vector<4x128xf32>
    %cst_14 = arith.constant dense<0.000000e+00> : vector<128xf32>
    %53 = vector.multi_reduction <add>, %52, %cst_14 [0] : vector<4x128xf32> to vector<128xf32>
    %54 = vector.shape_cast %53 : vector<128xf32> to vector<1x128xf32>
    %cst_15 = arith.constant 1.000000e+00 : f32
    %55 = vector.broadcast %cst_15 : f32 to vector<1x128xf32>
    %56 = arith.subf %55, %50 : vector<1x128xf32>
    %cst_16 = arith.constant 1.000000e+00 : f32
    %57 = vector.broadcast %cst_16 : f32 to vector<1x128xf32>
    %58 = arith.mulf %57, %56 : vector<1x128xf32>
    %59 = arith.mulf %58, %56 : vector<1x128xf32>
    %cst_17 = arith.constant 0.000000e+00 : f32
    %60 = vector.broadcast %cst_17 : f32 to vector<1x128xf32>
    %61 = arith.subf %60, %59 : vector<1x128xf32>
    %62 = arith.mulf %49, %54 : vector<1x128xf32>
    %63 = arith.mulf %61, %62 : vector<1x128xf32>
    %64 = vector.extract_strided_slice %13 {offsets = [0, 0], sizes = [1, 128], strides = [1, 1]} : vector<4x128xf32> to vector<1x128xf32>
    %65 = vector.extract_strided_slice %13 {offsets = [1, 0], sizes = [1, 128], strides = [1, 1]} : vector<4x128xf32> to vector<1x128xf32>
    %66 = vector.extract_strided_slice %13 {offsets = [2, 0], sizes = [1, 128], strides = [1, 1]} : vector<4x128xf32> to vector<1x128xf32>
    %67 = vector.extract_strided_slice %13 {offsets = [3, 0], sizes = [1, 128], strides = [1, 1]} : vector<4x128xf32> to vector<1x128xf32>
    %68 = vector.extract_strided_slice %15 {offsets = [0, 0], sizes = [1, 128], strides = [1, 1]} : vector<4x128xf32> to vector<1x128xf32>
    %69 = arith.mulf %68, %66 : vector<1x128xf32>
    %70 = arith.addf %69, %64 : vector<1x128xf32>
    %71 = vector.extract_strided_slice %15 {offsets = [1, 0], sizes = [1, 128], strides = [1, 1]} : vector<4x128xf32> to vector<1x128xf32>
    %72 = arith.mulf %71, %67 : vector<1x128xf32>
    %73 = arith.addf %72, %65 : vector<1x128xf32>
    %74 = vector.extract_strided_slice %15 {offsets = [2, 0], sizes = [1, 128], strides = [1, 1]} : vector<4x128xf32> to vector<1x128xf32>
    %75 = math.exp %74 : vector<1x128xf32>
    %76 = arith.mulf %75, %66 : vector<1x128xf32>
    %77 = vector.extract_strided_slice %15 {offsets = [3, 0], sizes = [1, 128], strides = [1, 1]} : vector<4x128xf32> to vector<1x128xf32>
    %78 = math.exp %77 : vector<1x128xf32>
    %79 = arith.mulf %78, %67 : vector<1x128xf32>
    %cst_18 = arith.constant 5.000000e-01 : f32
    %80 = vector.broadcast %cst_18 : f32 to vector<1x128xf32>
    %81 = arith.mulf %80, %76 : vector<1x128xf32>
    %82 = arith.subf %70, %81 : vector<1x128xf32>
    %cst_19 = arith.constant 5.000000e-01 : f32
    %83 = vector.broadcast %cst_19 : f32 to vector<1x128xf32>
    %84 = arith.mulf %83, %79 : vector<1x128xf32>
    %85 = arith.subf %73, %84 : vector<1x128xf32>
    %cst_20 = arith.constant 5.000000e-01 : f32
    %86 = vector.broadcast %cst_20 : f32 to vector<1x128xf32>
    %87 = arith.mulf %86, %76 : vector<1x128xf32>
    %88 = arith.addf %70, %87 : vector<1x128xf32>
    %cst_21 = arith.constant 5.000000e-01 : f32
    %89 = vector.broadcast %cst_21 : f32 to vector<1x128xf32>
    %90 = arith.mulf %89, %79 : vector<1x128xf32>
    %91 = arith.addf %73, %90 : vector<1x128xf32>
    %92 = vector.extract_strided_slice %17 {offsets = [0, 0], sizes = [1, 128], strides = [1, 1]} : vector<4x128xf32> to vector<1x128xf32>
    %93 = arith.mulf %92, %66 : vector<1x128xf32>
    %94 = arith.addf %93, %64 : vector<1x128xf32>
    %95 = vector.extract_strided_slice %17 {offsets = [1, 0], sizes = [1, 128], strides = [1, 1]} : vector<4x128xf32> to vector<1x128xf32>
    %96 = arith.mulf %95, %67 : vector<1x128xf32>
    %97 = arith.addf %96, %65 : vector<1x128xf32>
    %98 = vector.extract_strided_slice %17 {offsets = [2, 0], sizes = [1, 128], strides = [1, 1]} : vector<4x128xf32> to vector<1x128xf32>
    %99 = math.exp %98 : vector<1x128xf32>
    %100 = arith.mulf %99, %66 : vector<1x128xf32>
    %101 = vector.extract_strided_slice %17 {offsets = [3, 0], sizes = [1, 128], strides = [1, 1]} : vector<4x128xf32> to vector<1x128xf32>
    %102 = math.exp %101 : vector<1x128xf32>
    %103 = arith.mulf %102, %67 : vector<1x128xf32>
    %cst_22 = arith.constant 5.000000e-01 : f32
    %104 = vector.broadcast %cst_22 : f32 to vector<1x128xf32>
    %105 = arith.mulf %104, %100 : vector<1x128xf32>
    %106 = arith.subf %94, %105 : vector<1x128xf32>
    %cst_23 = arith.constant 5.000000e-01 : f32
    %107 = vector.broadcast %cst_23 : f32 to vector<1x128xf32>
    %108 = arith.mulf %107, %103 : vector<1x128xf32>
    %109 = arith.subf %97, %108 : vector<1x128xf32>
    %cst_24 = arith.constant 5.000000e-01 : f32
    %110 = vector.broadcast %cst_24 : f32 to vector<1x128xf32>
    %111 = arith.mulf %110, %100 : vector<1x128xf32>
    %112 = arith.addf %94, %111 : vector<1x128xf32>
    %cst_25 = arith.constant 5.000000e-01 : f32
    %113 = vector.broadcast %cst_25 : f32 to vector<1x128xf32>
    %114 = arith.mulf %113, %103 : vector<1x128xf32>
    %115 = arith.addf %97, %114 : vector<1x128xf32>
    %116 = arith.minimumf %88, %112 : vector<1x128xf32>
    %117 = arith.maximumf %82, %106 : vector<1x128xf32>
    %118 = arith.subf %116, %117 : vector<1x128xf32>
    %cst_26 = arith.constant 0.000000e+00 : f32
    %119 = vector.broadcast %cst_26 : f32 to vector<1x128xf32>
    %120 = arith.maximumf %118, %119 : vector<1x128xf32>
    %121 = arith.minimumf %91, %115 : vector<1x128xf32>
    %122 = arith.maximumf %85, %109 : vector<1x128xf32>
    %123 = arith.subf %121, %122 : vector<1x128xf32>
    %cst_27 = arith.constant 0.000000e+00 : f32
    %124 = vector.broadcast %cst_27 : f32 to vector<1x128xf32>
    %125 = arith.maximumf %123, %124 : vector<1x128xf32>
    %126 = arith.mulf %120, %125 : vector<1x128xf32>
    %127 = arith.subf %88, %82 : vector<1x128xf32>
    %cst_28 = arith.constant 0.000000e+00 : f32
    %128 = vector.broadcast %cst_28 : f32 to vector<1x128xf32>
    %129 = arith.maximumf %127, %128 : vector<1x128xf32>
    %130 = arith.subf %91, %85 : vector<1x128xf32>
    %cst_29 = arith.constant 0.000000e+00 : f32
    %131 = vector.broadcast %cst_29 : f32 to vector<1x128xf32>
    %132 = arith.maximumf %130, %131 : vector<1x128xf32>
    %133 = arith.mulf %129, %132 : vector<1x128xf32>
    %134 = arith.subf %112, %106 : vector<1x128xf32>
    %cst_30 = arith.constant 0.000000e+00 : f32
    %135 = vector.broadcast %cst_30 : f32 to vector<1x128xf32>
    %136 = arith.maximumf %134, %135 : vector<1x128xf32>
    %137 = arith.subf %115, %109 : vector<1x128xf32>
    %cst_31 = arith.constant 0.000000e+00 : f32
    %138 = vector.broadcast %cst_31 : f32 to vector<1x128xf32>
    %139 = arith.maximumf %137, %138 : vector<1x128xf32>
    %140 = arith.mulf %136, %139 : vector<1x128xf32>
    %141 = arith.addf %133, %140 : vector<1x128xf32>
    %142 = arith.subf %141, %126 : vector<1x128xf32>
    %cst_32 = arith.constant 9.99999993E-9 : f32
    %143 = vector.broadcast %cst_32 : f32 to vector<1x128xf32>
    %144 = arith.addf %142, %143 : vector<1x128xf32>
    %145 = arith.divf %126, %144 : vector<1x128xf32>
    %146 = arith.addi %1, %5 : i32
    %147 = vector.broadcast %146 : i32 to vector<1x128xi32>
    %148 = arith.addi %3, %147 : vector<1x128xi32>
    %c64_i32 = arith.constant 64 : i32
    %149 = vector.broadcast %c64_i32 : i32 to vector<1x128xi32>
    %150 = arith.cmpi slt, %148, %149 : vector<1x128xi32>
    %cst_33 = arith.constant 0.000000e+00 : f32
    %151 = vector.broadcast %cst_33 : f32 to vector<1x128xf32>
    %152 = arith.select %150, %63, %151 : vector<1x128xi1>, vector<1x128xf32>
    %c0_34 = arith.constant 0 : index
    %c0_35 = arith.constant 0 : index
    %153 = arith.index_cast %5 : i32 to index
    %154 = vector.load %arg6[%c0_34, %c0_35, %153] : memref<1x4x128xf32, #tpu.memory_space<vmem>>, vector<1x1x128xf32>
    %155 = vector.shape_cast %154 : vector<1x1x128xf32> to vector<1x128xf32>
    %156 = vector.shape_cast %152 : vector<1x128xf32> to vector<1x1x128xf32>
    tpu.vector_store %arg6[%c0_34, %c0_35, %153], %156 {strides = array<i32>} : memref<1x4x128xf32, #tpu.memory_space<vmem>>, vector<1x1x128xf32>,
    %157 = arith.andi %150, %34 : vector<1x128xi1>
    %cst_36 = arith.constant 1.000000e+00 : f32
    %cst_37 = arith.constant 0.000000e+00 : f32
    %158 = vector.broadcast %cst_36 : f32 to vector<1x128xf32>
    %159 = vector.broadcast %cst_37 : f32 to vector<1x128xf32>
    %160 = arith.select %157, %158, %159 : vector<1x128xi1>, vector<1x128xf32>
    %c0_38 = arith.constant 0 : index
    %c1 = arith.constant 1 : index
    %161 = arith.index_cast %5 : i32 to index
    %162 = vector.load %arg6[%c0_38, %c1, %161] : memref<1x4x128xf32, #tpu.memory_space<vmem>>, vector<1x1x128xf32>
    %163 = vector.shape_cast %162 : vector<1x1x128xf32> to vector<1x128xf32>
    %164 = vector.shape_cast %160 : vector<1x128xf32> to vector<1x1x128xf32>
    tpu.vector_store %arg6[%c0_38, %c1, %161], %164 {strides = array<i32>} : memref<1x4x128xf32, #tpu.memory_space<vmem>>, vector<1x1x128xf32>,
    %165 = arith.andi %150, %36 : vector<1x128xi1>
    %cst_39 = arith.constant 1.000000e+00 : f32
    %cst_40 = arith.constant 0.000000e+00 : f32
    %166 = vector.broadcast %cst_39 : f32 to vector<1x128xf32>
    %167 = vector.broadcast %cst_40 : f32 to vector<1x128xf32>
    %168 = arith.select %165, %166, %167 : vector<1x128xi1>, vector<1x128xf32>
    %c0_41 = arith.constant 0 : index
    %c2 = arith.constant 2 : index
    %169 = arith.index_cast %5 : i32 to index
    %170 = vector.load %arg6[%c0_41, %c2, %169] : memref<1x4x128xf32, #tpu.memory_space<vmem>>, vector<1x1x128xf32>
    %171 = vector.shape_cast %170 : vector<1x1x128xf32> to vector<1x128xf32>
    %172 = vector.shape_cast %168 : vector<1x128xf32> to vector<1x1x128xf32>
    tpu.vector_store %arg6[%c0_41, %c2, %169], %172 {strides = array<i32>} : memref<1x4x128xf32, #tpu.memory_space<vmem>>, vector<1x1x128xf32>,
    %173 = arith.andi %150, %34 : vector<1x128xi1>
    %cst_42 = arith.constant 1.000000e+00 : f32
    %174 = vector.broadcast %cst_42 : f32 to vector<1x128xf32>
    %175 = arith.subf %174, %145 : vector<1x128xf32>
    %cst_43 = arith.constant 0.000000e+00 : f32
    %176 = vector.broadcast %cst_43 : f32 to vector<1x128xf32>
    %177 = arith.select %173, %175, %176 : vector<1x128xi1>, vector<1x128xf32>
    %c0_44 = arith.constant 0 : index
    %c3 = arith.constant 3 : index
    %178 = arith.index_cast %5 : i32 to index
    %179 = vector.load %arg6[%c0_44, %c3, %178] : memref<1x4x128xf32, #tpu.memory_space<vmem>>, vector<1x1x128xf32>
    %180 = vector.shape_cast %179 : vector<1x1x128xf32> to vector<1x128xf32>
    %181 = vector.shape_cast %177 : vector<1x128xf32> to vector<1x1x128xf32>
    tpu.vector_store %arg6[%c0_44, %c3, %178], %181 {strides = array<i32>} : memref<1x4x128xf32, #tpu.memory_space<vmem>>, vector<1x1x128xf32>,
    %c1_i32 = arith.constant 1 : i32
    return
  }
  func.func @transform_0(%arg0: i32, %arg1: i32) -> (i32, i32, i32) {
    %c0_i32 = arith.constant 0 : i32
    %c0_i32_0 = arith.constant 0 : i32
    return %arg1, %c0_i32, %arg0 : i32, i32, i32
  }
  func.func @transform_1(%arg0: i32, %arg1: i32) -> (i32, i32, i32) {
    %c0_i32 = arith.constant 0 : i32
    %c0_i32_0 = arith.constant 0 : i32
    return %arg1, %c0_i32, %arg0 : i32, i32, i32
  }
  func.func @transform_2(%arg0: i32, %arg1: i32) -> (i32, i32) {
    %c0_i32 = arith.constant 0 : i32
    %c0_i32_0 = arith.constant 0 : i32
    return %c0_i32, %arg0 : i32, i32
  }
  func.func @transform_3(%arg0: i32, %arg1: i32) -> (i32, i32) {
    %c0_i32 = arith.constant 0 : i32
    %c0_i32_0 = arith.constant 0 : i32
    %c0_i32_1 = arith.constant 0 : i32
    return %c0_i32, %c0_i32_0 : i32, i32
  }
  func.func @transform_4(%arg0: i32, %arg1: i32) -> (i32, i32, i32) {
    %c0_i32 = arith.constant 0 : i32
    %c0_i32_0 = arith.constant 0 : i32
    return %arg1, %c0_i32, %arg0 : i32, i32, i32
  }
}

</mosaic_0001>

<llo_original>
// kernel: tpu_custom_call.1
$region0: #{tpu_custom_call.1}
  #allocation0 [shape = 'u32[]', space=smem, size = 0x4, offset = 0x4, fixed_abs, tag = 'smem constant byte address 0x4 - core index']
  #allocation1 [shape = 'u32[72,128]{1,0:T(1,128)}', space=vmem, size = 0x9000, scoped, tag = 'internal scratch']
  %s0 = inlined_call_operand.hbm [shape: f32[2,8,64], index: 0, kind: input, shape index: {}]
  %s1 = inlined_call_operand.hbm [shape: f32[2,8,64], index: 1, kind: input, shape index: {}]
  %s2 = inlined_call_operand.vmem [shape: f32[4,64], index: 2, kind: input, shape index: {}]
  %s3 = inlined_call_operand.vmem [shape: f32[4,1], index: 3, kind: input, shape index: {}]
  %s4 = inlined_call_operand.hbm [shape: f32[2,4,64], index: 4, kind: output, shape index: {}]
  %s5 = sld [smem:[#allocation0]]
  $region57: #{tpu_custom_call.1} parent=0
    _
  %s7 = ssub.s32 1, %s5
  %s8 = scalar_select 0, %s7, %s5
  $region1: #{tpu_custom_call.1} parent=0
    #allocation2 [shape = 'u8[8192]{0}', space=vmem, size = 0x2000, scoped, tag = 'input window, operand 0']
    #allocation3 [shape = 's32[2]{0}', space=sflag, size = 0x8, scoped, tag = 'scoped memory for tpu_custom_call.1']
    #allocation4 [shape = 's32[2]{0}', space=sflag, size = 0x8, scoped, tag = 'scoped memory for tpu_custom_call.1']
    #allocation5 [shape = 'u8[8192]{0}', space=vmem, size = 0x2000, scoped, tag = 'input window, operand 1']
    #allocation6 [shape = 's32[2]{0}', space=sflag, size = 0x8, scoped, tag = 'scoped memory for tpu_custom_call.1']
    #allocation7 [shape = 'u8[4096]{0}', space=vmem, size = 0x1000, scoped, tag = 'output window, operand 0']
    %9 = vsyncpa [#allocation3], 0
    %s10 = scalar_lea.sflag [#allocation3], 1
    %11 = vsyncpa %s10, 0
    %12 = vsyncpa [#allocation6], 0
    %s13 = scalar_lea.sflag [#allocation6], 1
    %14 = vsyncpa %s13, 0
    %15 = vsyncpa [#allocation4], 0
    %s16 = scalar_lea.sflag [#allocation4], 1
    %17 = vsyncpa %s16, 0
    loop: start=0, step=1, limit=4
    $region2: #{tpu_custom_call.1} parent=1 // loop_pre_header
      _
    $region3: #{tpu_custom_call.1} parent=1 // loop_header
      %s19 = sphi 0, %s23
      %p20 = scmp.ge.s32.totalorder %s19, 4
      %s26 = sphi 0, %s38
      %s27 = sphi 0, %s34
      %s28 = sphi 0, %s26
      %s29 = sphi 0, %s27
      %s30 = sphi 0, %s28
      %s31 = sphi 0, %s29
      %s43 = sphi 0, %s45
      %s46 = sphi 0, %s43
      %s47 = sphi 0, %s46
      %s63 = sphi 0, %s47
      %s71 = sphi 0, %s73
      %s74 = sphi 0, %s71
      %s75 = sphi 0, %s74
      %s91 = sphi 0, %s75
      %s97 = sphi 0, %s99
      %s100 = sphi 0, %s97
      %s101 = sphi 0, %s100
      %s117 = sphi 0, %s101
      %s121 = sphi 0, %s121
      %s123 = sphi 0, %s121
      %s124 = sphi 0, %s123
      %s138 = sphi 0, %s124
      %s146 = sphi 0, %s148
      %s149 = sphi 0, %s146
      %s150 = sphi 0, %s149
      %s166 = sphi 0, %s150
    $region4: #{tpu_custom_call.1} parent=1 // loop_header_branch
      %22 = sbr.rel (%p20) target = $region8
    $region5: #{tpu_custom_call.1} parent=1 // loop_body
      %s24 = ssub.s32 %s19, 1
      %s25 = ssub.s32 %s19, 2
      %s32 = sadd.s32 1, %s27
      %p33 = scmp.ge.s32.totalorder %s32, 2
      %s34 = scalar_select %p33, 0, %s32
      %s35 = sadd.s32 1, %s26
      %s36 = scalar_select %p33, %s35, %s26
      %p37 = scmp.ge.s32.totalorder %s36, 1
      %s38 = scalar_select %p37, 0, %s36
      %s39 = ssub.s32 %s27, %s34
      %s40 = ssub.s32 %s26, %s38
      %s41 = sor.u32 %s39, %s40
      %p42 = scmp.eq.s32.totalorder %s41, 0
      %s44 = sadd.s32 %s43, 1
      %s45 = scalar_select %p42, %s43, %s44
      %p48 = pneg %p42
      %p49 = scmp.eq.s32.totalorder %s19, 1
      %p50 = por %p48, %p49
      %p51 = scmp.ne.s32.totalorder %s43, %s46
      %p52 = scmp.eq.s32.totalorder %s19, 0
      %p53 = por %p51, %p52
      %p54 = scmp.ne.s32.totalorder %s43, %s46
      %p55 = scmp.eq.s32.totalorder %s24, 1
      %p56 = por %p54, %p55
      %p57 = scmp.ne.s32.totalorder %s46, %s47
      %p58 = scmp.eq.s32.totalorder %s24, 0
      %p59 = por %p57, %p58
      %p60 = scmp.ne.s32.totalorder %s46, %s47
      %p61 = scmp.eq.s32.totalorder %s25, 1
      %p62 = por %p60, %p61
      %p64 = scmp.ne.s32.totalorder %s47, %s63
      %p65 = scmp.eq.s32.totalorder %s25, 0
      %p66 = por %p64, %p65
      %s67 = ssub.s32 %s27, %s34
      %s68 = ssub.s32 %s26, %s38
      %s69 = sor.u32 %s67, %s68
      %p70 = scmp.eq.s32.totalorder %s69, 0
      %s72 = sadd.s32 %s71, 1
      %s73 = scalar_select %p70, %s71, %s72
      %p76 = pneg %p70
      %p77 = scmp.eq.s32.totalorder %s19, 1
      %p78 = por %p76, %p77
      %p79 = scmp.ne.s32.totalorder %s71, %s74
      %p80 = scmp.eq.s32.totalorder %s19, 0
      %p81 = por %p79, %p80
      %p82 = scmp.ne.s32.totalorder %s71, %s74
      %p83 = scmp.eq.s32.totalorder %s24, 1
      %p84 = por %p82, %p83
      %p85 = scmp.ne.s32.totalorder %s74, %s75
      %p86 = scmp.eq.s32.totalorder %s24, 0
      %p87 = por %p85, %p86
      %p88 = scmp.ne.s32.totalorder %s74, %s75
      %p89 = scmp.eq.s32.totalorder %s25, 1
      %p90 = por %p88, %p89
      %p92 = scmp.ne.s32.totalorder %s75, %s91
      %p93 = scmp.eq.s32.totalorder %s25, 0
      %p94 = por %p92, %p93
      %s95 = ssub.s32 %s26, %s38
      %p96 = scmp.eq.s32.totalorder %s95, 0
      %s98 = sadd.s32 %s97, 1
      %s99 = scalar_select %p96, %s97, %s98
      %p102 = pneg %p96
      %p103 = scmp.eq.s32.totalorder %s19, 1
      %p104 = por %p102, %p103
      %p105 = scmp.ne.s32.totalorder %s97, %s100
      %p106 = scmp.eq.s32.totalorder %s19, 0
      %p107 = por %p105, %p106
      %p108 = scmp.ne.s32.totalorder %s97, %s100
      %p109 = scmp.eq.s32.totalorder %s24, 1
      %p110 = por %p108, %p109
      %p111 = scmp.ne.s32.totalorder %s100, %s101
      %p112 = scmp.eq.s32.totalorder %s24, 0
      %p113 = por %p111, %p112
      %p114 = scmp.ne.s32.totalorder %s100, %s101
      %p115 = scmp.eq.s32.totalorder %s25, 1
      %p116 = por %p114, %p115
      %p118 = scmp.ne.s32.totalorder %s101, %s117
      %p119 = scmp.eq.s32.totalorder %s25, 0
      %p120 = por %p118, %p119
      %s122 = sadd.s32 %s121, 1
      %p125 = scmp.eq.s32.totalorder %s19, 1
      %p126 = scmp.ne.s32.totalorder %s121, %s123
      %p127 = scmp.eq.s32.totalorder %s19, 0
      %p128 = por %p126, %p127
      %p129 = scmp.ne.s32.totalorder %s121, %s123
      %p130 = scmp.eq.s32.totalorder %s24, 1
      %p131 = por %p129, %p130
      %p132 = scmp.ne.s32.totalorder %s123, %s124
      %p133 = scmp.eq.s32.totalorder %s24, 0
      %p134 = por %p132, %p133
      %p135 = scmp.ne.s32.totalorder %s123, %s124
      %p136 = scmp.eq.s32.totalorder %s25, 1
      %p137 = por %p135, %p136
      %p139 = scmp.ne.s32.totalorder %s124, %s138
      %p140 = scmp.eq.s32.totalorder %s25, 0
      %p141 = por %p139, %p140
      %s142 = ssub.s32 %s27, %s34
      %s143 = ssub.s32 %s26, %s38
      %s144 = sor.u32 %s142, %s143
      %p145 = scmp.eq.s32.totalorder %s144, 0
      %s147 = sadd.s32 %s146, 1
      %s148 = scalar_select %p145, %s146, %s147
      %p151 = pneg %p145
      %p152 = scmp.eq.s32.totalorder %s19, 1
      %p153 = por %p151, %p152
      %p154 = scmp.ne.s32.totalorder %s146, %s149
      %p155 = scmp.eq.s32.totalorder %s19, 0
      %p156 = por %p154, %p155
      %p157 = scmp.ne.s32.totalorder %s146, %s149
      %p158 = scmp.eq.s32.totalorder %s24, 1
      %p159 = por %p157, %p158
      %p160 = scmp.ne.s32.totalorder %s149, %s150
      %p161 = scmp.eq.s32.totalorder %s24, 0
      %p162 = por %p160, %p161
      %p163 = scmp.ne.s32.totalorder %s149, %s150
      %p164 = scmp.eq.s32.totalorder %s25, 1
      %p165 = por %p163, %p164
      %p167 = scmp.ne.s32.totalorder %s150, %s166
      %p168 = scmp.eq.s32.totalorder %s25, 0
      %p169 = por %p167, %p168
      %p170 = scmp.le.s32.totalorder 1, %s19
      %p171 = scmp.lt.s32.totalorder %s19, 3
      %p172 = pnand %p170, %p171
      %p173 = pneg %p172
      // Predicated region
      $region9: #{tpu_custom_call.1} parent=5 // pred_check
        _
      $region10: #{tpu_custom_call.1} parent=5 // pred_check_branch
        %175 = sbr.rel (%p172) target = $region12
      $region11: #{tpu_custom_call.1} parent=5 // pred_region
        %s176 = ssub.s32 %s19, 1
        // Predicated region
        $region13: #{tpu_custom_call.1} parent=11 // pred_check
          %p177 = pneg %p113
        $region14: #{tpu_custom_call.1} parent=11 // pred_check_branch
          %179 = sbr.rel (%p177) target = $region16
        $region15: #{tpu_custom_call.1} parent=11 // pred_region
          %p180 = scmp.lt.s32.totalorder %s28, 0
          %s181 = scalar_select %p180, %s28, 0
          %s182 = smul.addr %s181, 4
          %s183 = scalar_lea.vmem %s2, %s182
        $region16: #{tpu_custom_call.1} parent=11 // pred_fallthru
          _
        // Predicated region
        $region17: #{tpu_custom_call.1} parent=11 // pred_check
          %p184 = pneg %p134
        $region18: #{tpu_custom_call.1} parent=11 // pred_check_branch
          %186 = sbr.rel (%p184) target = $region20
        $region19: #{tpu_custom_call.1} parent=11 // pred_region
          _
        $region20: #{tpu_custom_call.1} parent=11 // pred_fallthru
          _
      $region12: #{tpu_custom_call.1} parent=5 // pred_fallthru
        _
      %p187 = scmp.lt.s32.totalorder %s19, 2
      // Predicated region
      $region21: #{tpu_custom_call.1} parent=5 // pred_check
        %p188 = pneg %p187
      $region22: #{tpu_custom_call.1} parent=5 // pred_check_branch
        %190 = sbr.rel (%p188) target = $region24
      $region23: #{tpu_custom_call.1} parent=5 // pred_region
        // Predicated region
        $region25: #{tpu_custom_call.1} parent=23 // pred_check
          %p191 = pneg %p53
        $region26: #{tpu_custom_call.1} parent=23 // pred_check_branch
          %193 = sbr.rel (%p191) target = $region28
        $region27: #{tpu_custom_call.1} parent=23 // pred_region
          %s194 = sand.u32 %s43, 1
          %s195 = scalar_lea.sflag [#allocation3], %s194
          %s196 = sand.u32 %s43, 1
          %s197 = smul.addr %s196, 8
          %s198 = scalar_lea.vmem [#allocation2], %s197
          %200 = vsyncadd %s195, 0
          %s201 = sadd.s32 %s26, %s27
          %s202 = smul.addr %s201, 8
          %s203 = scalar_lea.hbm %s0, %s202
          %s205 = sshll.u32 %s203, 4
          %s206 = int_to_ptr.hbm [resolvable:$true] %s205
          %s207 = sshll.u32 %s198, 4
          %s208 = int_to_ptr.vmem [resolvable:$true] %s207
          %210 = dma.hbm_to_vmem [thread:$0]  %s206, 128, %s208, %s195
        $region28: #{tpu_custom_call.1} parent=23 // pred_fallthru
          _
        // Predicated region
        $region29: #{tpu_custom_call.1} parent=23 // pred_check
          %p211 = pneg %p81
        $region30: #{tpu_custom_call.1} parent=23 // pred_check_branch
          %213 = sbr.rel (%p211) target = $region32
        $region31: #{tpu_custom_call.1} parent=23 // pred_region
          %s214 = sand.u32 %s71, 1
          %s215 = scalar_lea.sflag [#allocation6], %s214
          %s216 = sand.u32 %s71, 1
          %s217 = smul.addr %s216, 8
          %s218 = scalar_lea.vmem [#allocation5], %s217
          %220 = vsyncadd %s215, 0
          %s221 = sadd.s32 %s26, %s27
          %s222 = smul.addr %s221, 8
          %s223 = scalar_lea.hbm %s1, %s222
          %s225 = sshll.u32 %s223, 4
          %s226 = int_to_ptr.hbm [resolvable:$true] %s225
          %s227 = sshll.u32 %s218, 4
          %s228 = int_to_ptr.vmem [resolvable:$true] %s227
          %230 = dma.hbm_to_vmem [thread:$0]  %s226, 128, %s228, %s215
        $region32: #{tpu_custom_call.1} parent=23 // pred_fallthru
          _
      $region24: #{tpu_custom_call.1} parent=5 // pred_fallthru
        _
      %p231 = scmp.le.s32.totalorder 1, %s19
      %p232 = scmp.lt.s32.totalorder %s19, 3
      %p233 = pnand %p231, %p232
      %p234 = pneg %p233
      // Predicated region
      $region33: #{tpu_custom_call.1} parent=5 // pred_check
        _
      $region34: #{tpu_custom_call.1} parent=5 // pred_check_branch
        %236 = sbr.rel (%p233) target = $region36
      $region35: #{tpu_custom_call.1} parent=5 // pred_region
        %s237 = ssub.s32 %s19, 1
        %s238 = sand.u32 %s46, 1
        %s239 = scalar_lea.sflag [#allocation3], %s238
        %s240 = sand.u32 %s46, 1
        %s241 = smul.addr %s240, 8
        %s242 = scalar_lea.vmem [#allocation2], %s241
        // Predicated region
        $region37: #{tpu_custom_call.1} parent=35 // pred_check
          %p243 = pneg %p59
        $region38: #{tpu_custom_call.1} parent=35 // pred_check_branch
          %245 = sbr.rel (%p243) target = $region40
        $region39: #{tpu_custom_call.1} parent=35 // pred_region
          %247 = dma.done %s239, 128
        $region40: #{tpu_custom_call.1} parent=35 // pred_fallthru
          _
        %s248 = sand.u32 %s74, 1
        %s249 = scalar_lea.sflag [#allocation6], %s248
        %s250 = sand.u32 %s74, 1
        %s251 = smul.addr %s250, 8
        %s252 = scalar_lea.vmem [#allocation5], %s251
        // Predicated region
        $region41: #{tpu_custom_call.1} parent=35 // pred_check
          %p253 = pneg %p87
        $region42: #{tpu_custom_call.1} parent=35 // pred_check_branch
          %255 = sbr.rel (%p253) target = $region44
        $region43: #{tpu_custom_call.1} parent=35 // pred_region
          %257 = dma.done %s249, 128
        $region44: #{tpu_custom_call.1} parent=35 // pred_fallthru
          _
        %s258 = sand.u32 %s46, 1
        %s259 = scalar_lea.sflag [#allocation3], %s258
        %s260 = sand.u32 %s46, 1
        %s261 = smul.addr %s260, 8
        %s262 = scalar_lea.vmem [#allocation2], %s261
        %p263 = pneg %p59
        %p264 = pneg %p56
        %s265 = sand.u32 %s74, 1
        %s266 = scalar_lea.sflag [#allocation6], %s265
        %s267 = sand.u32 %s74, 1
        %s268 = smul.addr %s267, 8
        %s269 = scalar_lea.vmem [#allocation5], %s268
        %p270 = pneg %p87
        %p271 = pneg %p84
        %p272 = scmp.lt.s32.totalorder %s28, 0
        %s273 = scalar_select %p272, %s28, 0
        %s274 = smul.addr %s273, 4
        %s275 = scalar_lea.vmem %s2, %s274
        %p276 = pneg %p113
        %p277 = pneg %p110
        %p278 = pneg %p134
        %p279 = pneg %p131
        %p280 = pneg %p162
        %p281 = pneg %p159
        %s282 = sand.u32 %s149, 1
        %s283 = scalar_lea.sflag [#allocation4], %s282
        %s284 = sand.u32 %s149, 1
        %s285 = smul.addr %s284, 4
        %s286 = scalar_lea.vmem [#allocation7], %s285
        %p287 = scmp.lt.s32.totalorder %s28, 0
        %s288 = scalar_select %p287, %s28, 0
        %s289 = smul.addr %s288, 4
        %s290 = scalar_lea.vmem %s2, %s289
        %v291 = vld [vmem:[%s3] sm:$0xf]
        %s292 = smul.u32 %s28, 128
        %v293 = vlaneseq
        %v294 = vshrl.u32 %v293, 7
        %v295 = vlaneseq
        %v296 = vand.u32 %v295, 127
        %v297 = vld [vmem:[%s242] sm:$0xff]
        %v298 = vld [vmem:[%s252] sm:$0xff]
        %v299 = vld [vmem:[%s290] sm:$0xf]
        %vm300 = vcmask 1043456
        %v301 = vsel %vm300, %v298, -inf
        %v302 = vrot.slane %v301, 4
        %v303 = vmax.f32 %v301, %v302
        %v304 = vrot.slane %v303, 2
        %v305 = vmax.f32 %v303, %v304
        %v306 = vrot.slane %v305, 1
        %v307 = vmax.f32 %v305, %v306
        %vm308 = vcmp.eq.f32.partialorder %v298, %v307
        %v309 = vsel %vm308, %v294, 4
        %v310 = vsel %vm300, %v309, 2147483647
        %v311 = vrot.slane %v310, 4
        %vm312 = vcmp.lt.s32.totalorder %v310, %v311
        %v313 = vsel %vm312, %v310, %v311
        %v314 = vrot.slane %v313, 2
        %vm315 = vcmp.lt.s32.totalorder %v313, %v314
        %v316 = vsel %vm315, %v313, %v314
        %v317 = vrot.slane %v316, 1
        %vm318 = vcmp.lt.s32.totalorder %v316, %v317
        %v319 = vsel %vm318, %v316, %v317
        %vm320 = vcmp.eq.s32.totalorder %v294, %v319
        %v321 = vsel %vm320, 1, 0
        %v322 = vcvt.s32.f32 %v321
        %vm323 = vcmp.ne.s32.totalorder %v319, 0
        %vm324 = vcmp.eq.f32.partialorder %v307, 1.0
        %vm325 = vmand %vm323, %vm324
        %vm326 = vcmp.eq.s32.totalorder %v319, 0
        %v327 = vsel %vm300, %v297, -inf
        %v328 = vrot.slane %v327, 4
        %v329 = vmax.f32 %v327, %v328
        %v330 = vrot.slane %v329, 2
        %v331 = vmax.f32 %v329, %v330
        %v332 = vrot.slane %v331, 1
        %v333 = vmax.f32 %v331, %v332
        %v334 = vsub.f32 %v297, %v333
        %v335 = vmul.f32 %v334, 1.442695
        %v336 = vpow.pop %v335
        %v337 = vsel %vm300, %v336, 0.0
        %v338 = vrot.slane %v337, 4
        %v339 = vadd.f32 %v337, %v338
        %v340 = vrot.slane %v339, 2
        %v341 = vadd.f32 %v339, %v340
        %v342 = vrot.slane %v341, 1
        %v343 = vadd.f32 %v341, %v342
        %v344 = vlog2.pop %v343
        %v345 = vmul.f32 %v344, 0.6931472
        %v346 = vsub.f32 %v334, %v345
        %v347 = vmul.f32 %v346, %v322
        %v348 = vsel %vm300, %v347, 0.0
        %v349 = vrot.slane %v348, 4
        %v350 = vadd.f32 %v348, %v349
        %v351 = vrot.slane %v350, 2
        %v352 = vadd.f32 %v350, %v351
        %v353 = vrot.slane %v352, 1
        %v354 = vadd.f32 %v352, %v353
        %v355 = vmul.f32 %v354, 1.442695
        %v356 = vpow.pop %v355
        %358 = vset.pattern.permute.xlu0 0
        %359 = vperm.xlu0 %358, %v291
        %v360 = vpop.permute.xlu0 %359
        %v362 = vmul.f32 %v360, %v322
        %v363 = vsel %vm300, %v362, 0.0
        %v364 = vrot.slane %v363, 4
        %v365 = vadd.f32 %v363, %v364
        %v366 = vrot.slane %v365, 2
        %v367 = vadd.f32 %v365, %v366
        %v368 = vrot.slane %v367, 1
        %v369 = vadd.f32 %v367, %v368
        %v370 = vsub.f32 1.0, %v356
        %v371 = vmul.f32 %v370, %v370
        %v372 = vsub.f32 0.0, %v371
        %v373 = vmul.f32 %v354, %v369
        %v374 = vmul.f32 %v372, %v373
        %v376 = vrot.slane %v299, 6
        %v378 = vmul.f32 %v297, %v376
        %v379 = vrot.slane %v299, 4
        %v381 = vadd.f32 %v378, %v379
        %v382 = vmul.f32 %v297, 1.442695
        %v383 = vpow.pop %v382
        %v384 = vmul.f32 %v383, %v379
        %v385 = vmul.f32 %v384, 0.5
        %v387 = vrot.slane %v385, 2
        %v389 = vsub.f32 %v381, %v387
        %v390 = vadd.f32 %v381, %v387
        %v391 = vmul.f32 %v298, %v376
        %v392 = vadd.f32 %v391, %v379
        %v393 = vmul.f32 %v298, 1.442695
        %v394 = vpow.pop %v393
        %v395 = vmul.f32 %v394, %v379
        %v396 = vmul.f32 %v395, 0.5
        %v398 = vrot.slane %v396, 2
        %v400 = vsub.f32 %v392, %v398
        %v401 = vadd.f32 %v392, %v398
        %v402 = vmin.f32 %v390, %v401
        %v403 = vmax.f32 %v389, %v400
        %v404 = vsub.f32 %v402, %v403
        %v405 = vmax.f32 %v404, 0.0
        %v407 = vrot.slane %v405, 1
        %v409 = vmul.f32 %v405, %v407
        %v410 = vsub.f32 %v390, %v389
        %v411 = vmax.f32 %v410, 0.0
        %v413 = vrot.slane %v411, 1
        %v415 = vmul.f32 %v411, %v413
        %v416 = vsub.f32 %v401, %v400
        %v417 = vmax.f32 %v416, 0.0
        %v419 = vrot.slane %v417, 1
        %v421 = vmul.f32 %v417, %v419
        %v422 = vadd.f32 %v415, %v421
        %v423 = vsub.f32 %v422, %v409
        %v424 = vadd.f32 %v423, 1e-08
        %v425 = vrcp.pop %v424
        %v426 = vmul.f32 %v424, %v425
        %v427 = vsub.f32 1.0, %v426
        %v428 = vmul.f32 %v425, %v427
        %v429 = vadd.f32 %v425, %v428
        %vm430 = vweird.f32 %v424
        %vm431 = vweird.f32 %v425
        %vm432 = vmor %vm430, %vm431
        %v433 = vsel %vm432, %v425, %v429
        %v434 = vand.u32 2147483647, %v424
        %vm435 = vcmp.eq.f32.partialorder %v434, 8.507059e+37
        %v436 = vand.u32 %v424, 2147483648
        %v437 = vor.u32 1.1754944e-38, %v436
        %v438 = vsel %vm435, %v437, %v433
        %v439 = vmul.f32 %v409, %v438
        %s440 = sadd.s32 %s292, 0
        %v441 = vstv %s440
        %v442 = vadd.s32 %v296, %v441
        %vm443 = vcmp.lt.s32.totalorder %v442, 64
        %v444 = vsel %vm443, %v374, 0.0
        %445 = vst [vmem:[%s286] sm:$0x1] %v444
        %vm446 = vmand %vm443, %vm325
        %v447 = vsel %vm446, 1.0, 0.0
        %448 = vst [vmem:[%s286 + $0x1] sm:$0x1] %v447
        %vm449 = vmand %vm443, %vm326
        %v450 = vsel %vm449, 1.0, 0.0
        %451 = vst [vmem:[%s286 + $0x2] sm:$0x1] %v450
        %v452 = vsub.f32 1.0, %v439
        %v453 = vsel %vm446, %v452, 0.0
        %454 = vst [vmem:[%s286 - $0x1] sm:$0x10] %v453
        %s455 = sand.u32 %s149, 1
        %s456 = scalar_lea.sflag [#allocation4], %s455
        %s457 = sand.u32 %s149, 1
        %s458 = smul.addr %s457, 4
        %s459 = scalar_lea.vmem [#allocation7], %s458
        // Predicated region
        $region45: #{tpu_custom_call.1} parent=35 // pred_check
          %p460 = pneg %p159
        $region46: #{tpu_custom_call.1} parent=35 // pred_check_branch
          %462 = sbr.rel (%p460) target = $region48
        $region47: #{tpu_custom_call.1} parent=35 // pred_region
          %464 = vsyncadd %s456, 0
          %s465 = sadd.s32 %s28, %s29
          %s466 = smul.addr %s465, 4
          %s467 = scalar_lea.hbm %s4, %s466
          %s469 = sshll.u32 %s459, 4
          %s470 = int_to_ptr.vmem [resolvable:$true] %s469
          %s471 = sshll.u32 %s467, 4
          %s472 = int_to_ptr.hbm [resolvable:$true] %s471
          %474 = dma.vmem_to_hbm [thread:$0]  %s470, 64, %s472, %s456
        $region48: #{tpu_custom_call.1} parent=35 // pred_fallthru
          _
      $region36: #{tpu_custom_call.1} parent=5 // pred_fallthru
        _
      %p475 = scmp.le.s32.totalorder 2, %s19
      // Predicated region
      $region49: #{tpu_custom_call.1} parent=5 // pred_check
        %p476 = pneg %p475
      $region50: #{tpu_custom_call.1} parent=5 // pred_check_branch
        %478 = sbr.rel (%p476) target = $region52
      $region51: #{tpu_custom_call.1} parent=5 // pred_region
        %s479 = ssub.s32 %s19, 2
        // Predicated region
        $region53: #{tpu_custom_call.1} parent=51 // pred_check
          %p480 = pneg %p165
        $region54: #{tpu_custom_call.1} parent=51 // pred_check_branch
          %482 = sbr.rel (%p480) target = $region56
        $region55: #{tpu_custom_call.1} parent=51 // pred_region
          %s483 = sand.u32 %s150, 1
          %s484 = scalar_lea.sflag [#allocation4], %s483
          %s485 = sand.u32 %s150, 1
          %s486 = smul.addr %s485, 4
          %s487 = scalar_lea.vmem [#allocation7], %s486
          %489 = dma.done %s484, 64
        $region56: #{tpu_custom_call.1} parent=51 // pred_fallthru
          _
      $region52: #{tpu_custom_call.1} parent=5 // pred_fallthru
        _
    $region6: #{tpu_custom_call.1} parent=1 // loop_footer
      %s23 = sadd.s32 1, %s19
    $region7: #{tpu_custom_call.1} parent=1 // loop_footer_branch
      %18 = sbr.rel target = $region3
    $region8: #{tpu_custom_call.1} parent=1 // loop_exit
      _
    %490 = vsyncpa [#allocation3], 1
    %s491 = scalar_lea.sflag [#allocation3], 1
    %492 = vsyncpa %s491, 1
    %493 = vsyncpa [#allocation6], 1
    %s494 = scalar_lea.sflag [#allocation6], 1
    %495 = vsyncpa %s494, 1
    %496 = vsyncpa [#allocation4], 1
    %s497 = scalar_lea.sflag [#allocation4], 1
    %498 = vsyncpa %s497, 1

</llo_original>
